<compile_context>
chip_gen: v7x
topology: tpu7x:2x2x1
jax: 0.10.0
libtpu: 0.0.40
codegen_flags: <defaults>
</compile_context>

<pallas_src>
import math
import functools

import jax
import jax.numpy as jnp
from jax.experimental import pallas as pl
from jax.experimental.pallas import tpu as pltpu


def _sdpa_kernel(q_ref, k_ref, v_ref, mask_ref, ctx_ref, attn_ref, *,
                 scale, mxu_bf16):
    # Blocks: q (TBH, Tq, D), k/v (TBH, S, D), mask (TBH, Tq, S) bool.
    q = q_ref[...] * scale            # scale Q (cheaper than scaling scores)
    k = k_ref[...]
    v = v_ref[...]
    if mxu_bf16:
        q = q.astype(jnp.bfloat16)
        k = k.astype(jnp.bfloat16)
        v = v.astype(jnp.bfloat16)

    # scores = Q @ K^T without materializing a transpose (contract last dims).
    scores = jnp.einsum("bqd,bkd->bqk", q, k,
                        preferred_element_type=jnp.float32)     # (TBH, Tq, S)

    # masked_fill_(attn_mask, -1e9): True => masked.
    scores = jnp.where(mask_ref[...], jnp.float32(-1e9), scores)

    # Numerically stable row softmax.
    s_max = jnp.max(scores, axis=-1, keepdims=True)
    e = jnp.exp(scores - s_max)
    denom = jnp.sum(e, axis=-1, keepdims=True)
    inv = pl.reciprocal(denom, approx=True)      # EUP vrcp (otherwise idle slot)
    inv = inv * (2.0 - denom * inv)              # one Newton step -> ~exact f32
    attn = e * inv

    p = attn.astype(jnp.bfloat16) if mxu_bf16 else attn
    ctx = jnp.einsum("bqk,bkd->bqd", p, v,
                     preferred_element_type=jnp.float32)

    ctx_ref[...] = ctx.astype(ctx_ref.dtype)
    attn_ref[...] = attn.astype(attn_ref.dtype)


def _largest_divisor_leq(n, cap):
    cap = max(1, min(int(cap), n))
    for t in range(cap, 0, -1):
        if n % t == 0:
            return t
    return 1


def _largest_aligned_tile(n, preferred, align):
    """Largest tile <= preferred that divides n and is a multiple of align,
    or n itself (full dim is always a legal block)."""
    if n <= preferred:
        return n
    t = (preferred // align) * align
    while t >= align:
        if n % t == 0:
            return t
        t -= align
    return n


def _vmem_config():
    """Generation-aware (vmem_limit_bytes, tiling budget, two_tensorcores)."""
    vmem_cap = None
    try:
        vmem_cap = int(pltpu.get_tpu_info().vmem_capacity_bytes)
    except Exception:
        vmem_cap = None
    kind = ""
    try:
        kind = jax.devices()[0].device_kind.lower()
    except Exception:
        pass
    two_cores = "7" in kind                      # v7x: 2 TensorCores / chip
    if vmem_cap is None:
        vmem_cap = (64 if two_cores else 128) * 1024 * 1024
    # ~48 MiB on v7x (64 MiB/TC physical), ~96 MiB on v5e/v6e (128 MiB).
    vmem_limit = min((3 * vmem_cap) // 4, 96 * 1024 * 1024)
    budget = (3 * vmem_limit) // 4               # headroom for temporaries
    return vmem_limit, budget, two_cores


def scaled_dot_product_attention(Q, K, V, attn_mask, d_k,
                                 attn_dtype=jnp.float32,
                                 mxu_bf16=False):
    """Q, K, V: (B, H, S, d_k) float32; attn_mask: (B, H, S, S) bool.

    Returns (context (B, H, S, d_k) f32, attn (B, H, S, S) attn_dtype).
    Set mxu_bf16=True / attn_dtype=bf16 only if looser-than-f32 numerics are
    acceptable downstream.
    """
    B, H, S, D = Q.shape
    assert D == d_k
    BH = B * H

    q = Q.reshape(BH, S, D).astype(jnp.float32)
    k = K.reshape(BH, S, D).astype(jnp.float32)
    v = V.reshape(BH, S, D).astype(jnp.float32)
    # Bool mask goes in as-is (1 B/elem on TPU) -> no extra HBM convert pass.
    mask = attn_mask.reshape(BH, S, S)
    if mask.dtype != jnp.bool_:
        mask = mask != 0

    vmem_limit, budget, two_cores = _vmem_config()
    attn_bytes = jnp.dtype(attn_dtype).itemsize

    # ---- tile selection ---------------------------------------------------
    def bytes_per_bh(tq):
        return (2 * 2 * S * D * 4              # K, V   (double-buffered)
                + 2 * 2 * tq * D * 4           # Q, ctx (double-buffered)
                + 2 * tq * S * 1               # mask   (double-buffered, 1 B)
                + 2 * tq * S * attn_bytes      # attn out (double-buffered)
                + 3 * tq * S * 4)              # scores / exp / attn temps

    # Query tile keeps per-step VMEM at O(Tq*S); align to 32 for the 1-byte
    # mask's native (32,128) tile. Shrink Tq until one (b,h) slice fits.
    preferred = 512
    while True:
        Tq = _largest_aligned_tile(S, preferred, 32)
        if bytes_per_bh(Tq) <= budget or preferred <= 32 or Tq <= 32:
            break
        preferred = max(32, preferred // 2)

    # Heads per step: amortize grid-step overhead within the VMEM budget.
    cap = max(1, budget // max(bytes_per_bh(Tq), 1))
    if two_cores and BH > 1:
        # Keep >=2 steps on the BH ("parallel") axis so both v7x TensorCores
        # get work without duplicating the K/V fetch on the q axis.
        cap = min(cap, max(1, BH // 2))
    TBH = _largest_divisor_leq(BH, cap)

    grid = (BH // TBH, S // Tq)   # q-tile axis last -> K/V block stays resident

    kernel = functools.partial(_sdpa_kernel, scale=1.0 / math.sqrt(d_k),
                               mxu_bf16=mxu_bf16)

    q_spec = pl.BlockSpec((TBH, Tq, D), lambda b, i: (b, i, 0))
    kv_spec = pl.BlockSpec((TBH, S, D), lambda b, i: (b, 0, 0))
    mask_spec = pl.BlockSpec((TBH, Tq, S), lambda b, i: (b, i, 0))
    ctx_spec = pl.BlockSpec((TBH, Tq, D), lambda b, i: (b, i, 0))
    attn_spec = pl.BlockSpec((TBH, Tq, S), lambda b, i: (b, i, 0))

    ctx, attn = pl.pallas_call(
        kernel,
        out_shape=(
            jax.ShapeDtypeStruct((BH, S, D), jnp.float32),
            jax.ShapeDtypeStruct((BH, S, S), attn_dtype),
        ),
        grid_spec=pltpu.PrefetchScalarGridSpec(
            num_scalar_prefetch=0,
            grid=grid,
            in_specs=[q_spec, kv_spec, kv_spec, mask_spec],
            out_specs=[ctx_spec, attn_spec],
        ),
        compiler_params=pltpu.CompilerParams(
            dimension_semantics=("parallel", "arbitrary"),
            vmem_limit_bytes=int(vmem_limit),
        ),
    )(q, k, v, mask)

    return ctx.reshape(B, H, S, D), attn.reshape(B, H, S, S)


def _reference(Q, K, V, attn_mask, d_k):
    scores = jnp.einsum("bhqd,bhkd->bhqk", Q, K) / math.sqrt(d_k)
    scores = jnp.where(attn_mask, -1e9, scores)
    attn = jax.nn.softmax(scores, axis=-1)
    ctx = jnp.einsum("bhqk,bhkd->bhqd", attn, V)
    return ctx, attn


def _run_case(key, B, H, S, d_k, p_mask=0.25, atol=1e-4, rtol=1e-4):
    kq, kk, kv, km = jax.random.split(key, 4)
    Q = jax.random.normal(kq, (B, H, S, d_k), dtype=jnp.float32)
    K = jax.random.normal(kk, (B, H, S, d_k), dtype=jnp.float32)
    V = jax.random.normal(kv, (B, H, S, d_k), dtype=jnp.float32)
    attn_mask = jax.random.bernoulli(km, p=p_mask, shape=(B, H, S, S))

    ctx, attn = scaled_dot_product_attention(Q, K, V, attn_mask, d_k)
    jax.block_until_ready((ctx, attn))

    ctx_ref, attn_ref = _reference(Q, K, V, attn_mask, d_k)
    assert jnp.allclose(attn, attn_ref, atol=atol, rtol=rtol), "attn mismatch"
    assert jnp.allclose(ctx, ctx_ref, atol=atol, rtol=rtol), "context mismatch"


if __name__ == "__main__":
    key = jax.random.PRNGKey(0)
    k1, k2 = jax.random.split(key)

    # Small case consistent with the module (B=2, H=2, S=8, d_k=32).
    _run_case(k1, B=2, H=2, S=8, d_k=32)

    # Larger case exercising multi-head-per-step (TBH > 1) and the
    # generation-aware tile sizing.
    _run_case(k2, B=2, H=4, S=512, d_k=64)

    print("KERNEL_OK")
</pallas_src>

<mosaic_0001>
module attributes {stable_mosaic.version = 11 : i64} {
  func.func @_sdpa_kernel(%arg0: i32, %arg1: i32, %arg2: memref<4x8x32xf32, #tpu.memory_space<vmem>>, %arg3: memref<4x8x32xf32, #tpu.memory_space<vmem>>, %arg4: memref<4x8x32xf32, #tpu.memory_space<vmem>>, %arg5: memref<4x8x8xi32, #tpu.memory_space<vmem>>, %arg6: memref<4x8x32xf32, #tpu.memory_space<vmem>>, %arg7: memref<4x8x8xf32, #tpu.memory_space<vmem>>) attributes {dimension_semantics = [#tpu.dimension_semantics<parallel>, #tpu.dimension_semantics<arbitrary>], iteration_bounds = array<i64: 1, 1>, scalar_prefetch = 0 : i64, scratch_operands = 0 : i64, tpu.core_type = #tpu.core_type<tc>, window_params = [{transform_indices = @transform_0, window_bounds = array<i64: 4, 8, 32>}, {transform_indices = @transform_1, window_bounds = array<i64: 4, 8, 32>}, {transform_indices = @transform_2, window_bounds = array<i64: 4, 8, 32>}, {transform_indices = @transform_3, window_bounds = array<i64: 4, 8, 8>}, {transform_indices = @transform_4, window_bounds = array<i64: 4, 8, 32>}, {transform_indices = @transform_5, window_bounds = array<i64: 4, 8, 8>}]} {
    %c0 = arith.constant 0 : index
    %c0_0 = arith.constant 0 : index
    %c0_1 = arith.constant 0 : index
    %0 = vector.load %arg2[%c0, %c0_0, %c0_1] : memref<4x8x32xf32, #tpu.memory_space<vmem>>, vector<4x8x32xf32>
    %cst = arith.constant 0.176776692 : f32
    %1 = vector.broadcast %cst : f32 to vector<4x8x32xf32>
    %2 = arith.mulf %0, %1 : vector<4x8x32xf32>
    %c0_2 = arith.constant 0 : index
    %c0_3 = arith.constant 0 : index
    %c0_4 = arith.constant 0 : index
    %3 = vector.load %arg3[%c0_2, %c0_3, %c0_4] : memref<4x8x32xf32, #tpu.memory_space<vmem>>, vector<4x8x32xf32>
    %c0_5 = arith.constant 0 : index
    %c0_6 = arith.constant 0 : index
    %c0_7 = arith.constant 0 : index
    %4 = vector.load %arg4[%c0_5, %c0_6, %c0_7] : memref<4x8x32xf32, #tpu.memory_space<vmem>>, vector<4x8x32xf32>
    "tpu.trace_start"() <{level = 10 : i32, message = "bqd,bkd->bqk"}> : () -> ()
    %cst_8 = arith.constant dense<0.000000e+00> : vector<4x8x8xf32>
    %5 = tpu.matmul %2, %3, %cst_8 {dimension_numbers = #tpu.dot_dimension_numbers<[2], [2], [1], [1], [0, 0, 0, 1, 1, 1], [0], [0]>} : vector<4x8x32xf32>, vector<4x8x32xf32>, vector<4x8x8xf32> -> vector<4x8x8xf32>
    "tpu.trace_stop"() : () -> ()
    %c0_9 = arith.constant 0 : index
    %c0_10 = arith.constant 0 : index
    %c0_11 = arith.constant 0 : index
    %6 = vector.load %arg5[%c0_9, %c0_10, %c0_11] : memref<4x8x8xi32, #tpu.memory_space<vmem>>, vector<4x8x8xi32>
    %cst_12 = arith.constant dense<0> : vector<4x8x8xi32>
    %7 = arith.cmpi ne, %6, %cst_12 : vector<4x8x8xi32>
    %cst_13 = arith.constant -1.000000e+09 : f32
    %8 = vector.broadcast %cst_13 : f32 to vector<4x8x8xf32>
    %9 = arith.select %7, %8, %5 : vector<4x8x8xi1>, vector<4x8x8xf32>
    %cst_14 = arith.constant dense<0xFF800000> : vector<4x8xf32>
    %10 = vector.multi_reduction <maximumf>, %9, %cst_14 [2] : vector<4x8x8xf32> to vector<4x8xf32>
    %11 = vector.shape_cast %10 : vector<4x8xf32> to vector<4x8x1xf32>
    %12 = vector.broadcast %11 : vector<4x8x1xf32> to vector<4x8x8xf32>
    %13 = arith.subf %9, %12 : vector<4x8x8xf32>
    %14 = math.exp %13 : vector<4x8x8xf32>
    %cst_15 = arith.constant dense<0.000000e+00> : vector<4x8xf32>
    %15 = vector.multi_reduction <add>, %14, %cst_15 [2] : vector<4x8x8xf32> to vector<4x8xf32>
    %16 = vector.shape_cast %15 : vector<4x8xf32> to vector<4x8x1xf32>
    %17 = tpu.reciprocal %16 {approx = true} : vector<4x8x1xf32> -> vector<4x8x1xf32>
    %18 = arith.mulf %16, %17 : vector<4x8x1xf32>
    %cst_16 = arith.constant 2.000000e+00 : f32
    %19 = vector.broadcast %cst_16 : f32 to vector<4x8x1xf32>
    %20 = arith.subf %19, %18 : vector<4x8x1xf32>
    %21 = arith.mulf %17, %20 : vector<4x8x1xf32>
    %22 = vector.broadcast %21 : vector<4x8x1xf32> to vector<4x8x8xf32>
    %23 = arith.mulf %14, %22 : vector<4x8x8xf32>
    "tpu.trace_start"() <{level = 10 : i32, message = "bqk,bkd->bqd"}> : () -> ()
    %cst_17 = arith.constant dense<0.000000e+00> : vector<4x8x32xf32>
    %24 = tpu.matmul %23, %4, %cst_17 {dimension_numbers = #tpu.dot_dimension_numbers<[2], [1], [1], [2], [0, 0, 0, 1, 1, 2], [0], [0]>} : vector<4x8x8xf32>, vector<4x8x32xf32>, vector<4x8x32xf32> -> vector<4x8x32xf32>
    "tpu.trace_stop"() : () -> ()
    %c0_18 = arith.constant 0 : index
    %c0_19 = arith.constant 0 : index
    %c0_20 = arith.constant 0 : index
    %25 = vector.load %arg6[%c0_18, %c0_19, %c0_20] : memref<4x8x32xf32, #tpu.memory_space<vmem>>, vector<4x8x32xf32>
    tpu.vector_store %arg6[%c0_18, %c0_19, %c0_20], %24 {strides = array<i32>} : memref<4x8x32xf32, #tpu.memory_space<vmem>>, vector<4x8x32xf32>,
    %c0_21 = arith.constant 0 : index
    %c0_22 = arith.constant 0 : index
    %c0_23 = arith.constant 0 : index
    %26 = vector.load %arg7[%c0_21, %c0_22, %c0_23] : memref<4x8x8xf32, #tpu.memory_space<vmem>>, vector<4x8x8xf32>
    tpu.vector_store %arg7[%c0_21, %c0_22, %c0_23], %23 {strides = array<i32>} : memref<4x8x8xf32, #tpu.memory_space<vmem>>, vector<4x8x8xf32>,
    return
  }
  func.func @transform_0(%arg0: i32, %arg1: i32) -> (i32, i32, i32) {
    %c0_i32 = arith.constant 0 : i32
    %c0_i32_0 = arith.constant 0 : i32
    return %arg0, %arg1, %c0_i32 : i32, i32, i32
  }
  func.func @transform_1(%arg0: i32, %arg1: i32) -> (i32, i32, i32) {
    %c0_i32 = arith.constant 0 : i32
    %c0_i32_0 = arith.constant 0 : i32
    %c0_i32_1 = arith.constant 0 : i32
    return %arg0, %c0_i32, %c0_i32_0 : i32, i32, i32
  }
  func.func @transform_2(%arg0: i32, %arg1: i32) -> (i32, i32, i32) {
    %c0_i32 = arith.constant 0 : i32
    %c0_i32_0 = arith.constant 0 : i32
    %c0_i32_1 = arith.constant 0 : i32
    return %arg0, %c0_i32, %c0_i32_0 : i32, i32, i32
  }
  func.func @transform_3(%arg0: i32, %arg1: i32) -> (i32, i32, i32) {
    %c0_i32 = arith.constant 0 : i32
    %c0_i32_0 = arith.constant 0 : i32
    return %arg0, %arg1, %c0_i32 : i32, i32, i32
  }
  func.func @transform_4(%arg0: i32, %arg1: i32) -> (i32, i32, i32) {
    %c0_i32 = arith.constant 0 : i32
    %c0_i32_0 = arith.constant 0 : i32
    return %arg0, %arg1, %c0_i32 : i32, i32, i32
  }
  func.func @transform_5(%arg0: i32, %arg1: i32) -> (i32, i32, i32) {
    %c0_i32 = arith.constant 0 : i32
    %c0_i32_0 = arith.constant 0 : i32
    return %arg0, %arg1, %c0_i32 : i32, i32, i32
  }
}

</mosaic_0001>

<llo_original>
// kernel: tpu_custom_call.1
$region0: #{tpu_custom_call.1}
  #allocation0 [shape = 'u32[]', space=smem, size = 0x4, offset = 0x4, fixed_abs, tag = 'smem constant byte address 0x4 - core index']
  #allocation1 [shape = 'u32[144,128]{1,0:T(1,128)}', space=vmem, size = 0x12000, scoped, tag = 'internal scratch']
  %s0 = inlined_call_operand.hbm [shape: f32[4,8,32], index: 0, kind: input, shape index: {}]
  %s1 = inlined_call_operand.hbm [shape: f32[4,8,32], index: 1, kind: input, shape index: {}]
  %s2 = inlined_call_operand.hbm [shape: f32[4,8,32], index: 2, kind: input, shape index: {}]
  %s3 = inlined_call_operand.hbm [shape: s32[4,8,8], index: 3, kind: input, shape index: {}]
  %s4 = inlined_call_operand.hbm [shape: f32[4,8,32], index: 4, kind: output, shape index: {0}]
  %s5 = inlined_call_operand.hbm [shape: f32[4,8,8], index: 5, kind: output, shape index: {1}]
  %6 = xla_tuple %s4, %s5
  %s7 = sld [smem:[#allocation0]]
  $region50: #{tpu_custom_call.1} parent=0
    _
  %s9 = ssub.s32 1, %s7
  %s10 = scalar_select 0, %s9, %s7
  $region1: #{tpu_custom_call.1} parent=0
    #allocation2 [shape = 'u8[16384]{0}', space=vmem, size = 0x4000, scoped, tag = 'input window, operand 0, single buffered']
    #allocation3 [shape = 's32[1]{0}', space=sflag, size = 0x4, scoped, tag = 'scoped memory for tpu_custom_call.1']
    #allocation4 [shape = 's32[1]{0}', space=sflag, size = 0x4, scoped, tag = 'scoped memory for tpu_custom_call.1']
    #allocation5 [shape = 'u8[16384]{0}', space=vmem, size = 0x4000, scoped, tag = 'input window, operand 1, single buffered']
    #allocation6 [shape = 's32[1]{0}', space=sflag, size = 0x4, scoped, tag = 'scoped memory for tpu_custom_call.1']
    #allocation7 [shape = 'u8[16384]{0}', space=vmem, size = 0x4000, scoped, tag = 'input window, operand 2, single buffered']
    #allocation8 [shape = 'u8[16384]{0}', space=vmem, size = 0x4000, scoped, tag = 'input window, operand 3, single buffered']
    #allocation9 [shape = 's32[1]{0}', space=sflag, size = 0x4, scoped, tag = 'scoped memory for tpu_custom_call.1']
    #allocation10 [shape = 'u8[16384]{0}', space=vmem, size = 0x4000, scoped, tag = 'output window, operand 0, single buffered']
    #allocation11 [shape = 'u8[16384]{0}', space=vmem, size = 0x4000, scoped, tag = 'output window, operand 1, single buffered']
    #allocation12 [shape = 's32[1]{0}', space=sflag, size = 0x4, scoped, tag = 'scoped memory for tpu_custom_call.1']
    %11 = vsyncpa [#allocation3], 0
    %12 = vsyncpa [#allocation6], 0
    %13 = vsyncpa [#allocation9], 0
    %14 = vsyncpa [#allocation4], 0
    %15 = vsyncpa [#allocation12], 0
    // Predicated region
    $region2: #{tpu_custom_call.1} parent=1 // pred_check
      _
    $region3: #{tpu_custom_call.1} parent=1 // pred_check_branch
      %17 = sbr.rel (0) target = $region5
    $region4: #{tpu_custom_call.1} parent=1 // pred_region
      %s19 = ssub.s32 512, 512
      %20 = vsyncadd [#allocation3], %s19
      %s21 = sshll.u32 [#allocation2], 4
      %s22 = int_to_ptr.vmem [resolvable:$true] %s21
      %27 = dma.hbm_to_vmem [thread:$0]  %s0, 512, %s22, [#allocation3], 128, 128, 8
    $region5: #{tpu_custom_call.1} parent=1 // pred_fallthru
      _
    // Predicated region
    $region6: #{tpu_custom_call.1} parent=1 // pred_check
      _
    $region7: #{tpu_custom_call.1} parent=1 // pred_check_branch
      %29 = sbr.rel (0) target = $region9
    $region8: #{tpu_custom_call.1} parent=1 // pred_region
      %s31 = ssub.s32 512, 512
      %32 = vsyncadd [#allocation6], %s31
      %s33 = sshll.u32 [#allocation5], 4
      %s34 = int_to_ptr.vmem [resolvable:$true] %s33
      %39 = dma.hbm_to_vmem [thread:$0]  %s1, 512, %s34, [#allocation6], 128, 128, 8
    $region9: #{tpu_custom_call.1} parent=1 // pred_fallthru
      _
    // Predicated region
    $region10: #{tpu_custom_call.1} parent=1 // pred_check
      _
    $region11: #{tpu_custom_call.1} parent=1 // pred_check_branch
      %41 = sbr.rel (0) target = $region13
    $region12: #{tpu_custom_call.1} parent=1 // pred_region
      %s43 = ssub.s32 512, 512
      %44 = vsyncadd [#allocation6], %s43
      %s45 = sshll.u32 [#allocation7], 4
      %s46 = int_to_ptr.vmem [resolvable:$true] %s45
      %51 = dma.hbm_to_vmem [thread:$0]  %s2, 512, %s46, [#allocation6], 128, 128, 8
    $region13: #{tpu_custom_call.1} parent=1 // pred_fallthru
      _
    // Predicated region
    $region14: #{tpu_custom_call.1} parent=1 // pred_check
      _
    $region15: #{tpu_custom_call.1} parent=1 // pred_check_branch
      %53 = sbr.rel (0) target = $region17
    $region16: #{tpu_custom_call.1} parent=1 // pred_region
      %s55 = ssub.s32 512, 512
      %56 = vsyncadd [#allocation9], %s55
      %s57 = sshll.u32 [#allocation8], 4
      %s58 = int_to_ptr.vmem [resolvable:$true] %s57
      %63 = dma.hbm_to_vmem [thread:$0]  %s3, 512, %s58, [#allocation9], 128, 128, 8
    $region17: #{tpu_custom_call.1} parent=1 // pred_fallthru
      _
    // Predicated region
    $region18: #{tpu_custom_call.1} parent=1 // pred_check
      _
    $region19: #{tpu_custom_call.1} parent=1 // pred_check_branch
      %65 = sbr.rel (0) target = $region21
    $region20: #{tpu_custom_call.1} parent=1 // pred_region
      %66 = dma.done [#allocation3], 512
    $region21: #{tpu_custom_call.1} parent=1 // pred_fallthru
      _
    // Predicated region
    $region22: #{tpu_custom_call.1} parent=1 // pred_check
      _
    $region23: #{tpu_custom_call.1} parent=1 // pred_check_branch
      %68 = sbr.rel (0) target = $region25
    $region24: #{tpu_custom_call.1} parent=1 // pred_region
      %69 = dma.done [#allocation6], 512
    $region25: #{tpu_custom_call.1} parent=1 // pred_fallthru
      _
    // Predicated region
    $region26: #{tpu_custom_call.1} parent=1 // pred_check
      _
    $region27: #{tpu_custom_call.1} parent=1 // pred_check_branch
      %71 = sbr.rel (0) target = $region29
    $region28: #{tpu_custom_call.1} parent=1 // pred_region
      %72 = dma.done [#allocation6], 512
    $region29: #{tpu_custom_call.1} parent=1 // pred_fallthru
      _
    // Predicated region
    $region30: #{tpu_custom_call.1} parent=1 // pred_check
      _
    $region31: #{tpu_custom_call.1} parent=1 // pred_check_branch
      %74 = sbr.rel (0) target = $region33
    $region32: #{tpu_custom_call.1} parent=1 // pred_region
      %75 = dma.done [#allocation9], 512
    $region33: #{tpu_custom_call.1} parent=1 // pred_fallthru
      _
    %v76 = vld [vmem:[#allocation2] sm:$0xff]
    %v77 = vld [vmem:[#allocation2 + $0x8] sm:$0xff]
    %v78 = vld [vmem:[#allocation2 + $0x10] sm:$0xff]
    %v79 = vld [vmem:[#allocation2 + $0x18] sm:$0xff]
    %v80 = vmul.f32 %v76, 0.17677669
    %v81 = vmul.f32 %v77, 0.17677669
    %v82 = vmul.f32 %v78, 0.17677669
    %v83 = vmul.f32 %v79, 0.17677669
    %v84 = vld [vmem:[#allocation5] sm:$0xff]
    %v85 = vld [vmem:[#allocation5 + $0x8] sm:$0xff]
    %v86 = vld [vmem:[#allocation5 + $0x10] sm:$0xff]
    %v87 = vld [vmem:[#allocation5 + $0x18] sm:$0xff]
    %v88 = vld [vmem:[#allocation7] sm:$0xff]
    %v89 = vld [vmem:[#allocation7 + $0x8] sm:$0xff]
    %v90 = vld [vmem:[#allocation7 + $0x10] sm:$0xff]
    %v91 = vld [vmem:[#allocation7 + $0x18] sm:$0xff]
    %vm92 = vcmask 261120
    %v94 = vsel %vm92, %v80, 0
    %v97 = vsel %vm92, %v84, 0
    %99 = vmatprep.subr.mxu0 0.0
    %100 = vmatpush1.xpose.msra.mxu0 %v97
    %101 = vmatprep.subr.mxu0 0.0
    %102 = vmatpush1.xpose.msra.mxu0 0.0
    %103 = vmatprep.subr.mxu0 0.0
    %104 = vmatpush1.xpose.msra.mxu0 0.0
    %105 = vmatprep.subr.mxu0 0.0
    %106 = vmatpush1.xpose.msra.mxu0 0.0
    %107 = vmatprep.subr.mxu0 0.0
    %108 = vmatpush1.xpose.msra.mxu0 0.0
    %109 = vmatprep.subr.mxu0 0.0
    %110 = vmatpush1.xpose.msra.mxu0 0.0
    %111 = vmatprep.subr.mxu0 0.0
    %112 = vmatpush1.xpose.msra.mxu0 0.0
    %113 = vmatprep.subr.mxu0 0.0
    %114 = vmatpush1.xpose.msra.mxu0 0.0
    %115 = vmatprep.subr.mxu0 0.0
    %116 = vmatpush1.xpose.msra.mxu0 0.0
    %117 = vmatprep.subr.mxu0 0.0
    %118 = vmatpush1.xpose.msra.mxu0 0.0
    %119 = vmatprep.subr.mxu0 0.0
    %120 = vmatpush1.xpose.msra.mxu0 0.0
    %121 = vmatprep.subr.mxu0 0.0
    %122 = vmatpush1.xpose.msra.mxu0 0.0
    %123 = vmatprep.subr.mxu0 0.0
    %124 = vmatpush1.xpose.msra.mxu0 0.0
    %125 = vmatprep.subr.mxu0 0.0
    %126 = vmatpush1.xpose.msra.mxu0 0.0
    %127 = vmatprep.subr.mxu0 0.0
    %128 = vmatpush1.xpose.msra.mxu0 0.0
    %129 = vmatprep.subr.mxu0 0.0
    %130 = vmatpush1.xpose.msra.mxu0 0.0
    %131 = vmatprep.subr.mxu0 0.0
    %132 = vmatpush1.xpose.msra.mxu0 0.0
    %133 = vmatprep.subr.mxu0 0.0
    %134 = vmatpush1.xpose.msra.mxu0 0.0
    %135 = vmatprep.subr.mxu0 0.0
    %136 = vmatpush1.xpose.msra.mxu0 0.0
    %137 = vmatprep.subr.mxu0 0.0
    %138 = vmatpush1.xpose.msra.mxu0 0.0
    %139 = vmatprep.subr.mxu0 0.0
    %140 = vmatpush1.xpose.msra.mxu0 0.0
    %141 = vmatprep.subr.mxu0 0.0
    %142 = vmatpush1.xpose.msra.mxu0 0.0
    %143 = vmatprep.subr.mxu0 0.0
    %144 = vmatpush1.xpose.msra.mxu0 0.0
    %145 = vmatprep.subr.mxu0 0.0
    %146 = vmatpush1.xpose.msra.mxu0 0.0
    %147 = vmatprep.subr.mxu0 0.0
    %148 = vmatpush1.xpose.msra.mxu0 0.0
    %149 = vmatprep.subr.mxu0 0.0
    %150 = vmatpush1.xpose.msra.mxu0 0.0
    %151 = vmatprep.subr.mxu0 0.0
    %152 = vmatpush1.xpose.msra.mxu0 0.0
    %153 = vmatprep.subr.mxu0 0.0
    %154 = vmatpush1.xpose.msra.mxu0 0.0
    %155 = vmatprep.subr.mxu0 0.0
    %156 = vmatpush1.xpose.msra.mxu0 0.0
    %157 = vmatprep.subr.mxu0 0.0
    %158 = vmatpush1.xpose.msra.mxu0 0.0
    %159 = vmatprep.subr.mxu0 0.0
    %160 = vmatpush1.xpose.msra.mxu0 0.0
    %161 = vmatprep.subr.mxu0 0.0
    %162 = vmatpush1.xpose.msra.mxu0 0.0
    %163 = vmatprep.mubr.f32.mxu0 0.0
    %164 = vmatmul.mubr.f32.gmra.mrb[0].mxu0 %v94
    %v165 = vpop.f32.mrb[0].mxu0
    %v166 = vadd.f32 0.0, %v165
    %v167 = vpop.f32.mrb[0].mxu0
    %168 = vdwg.mxu0
    %v170 = vsel %vm92, %v81, 0
    %v173 = vsel %vm92, %v85, 0
    %175 = vmatprep.subr.mxu0 0.0
    %176 = vmatpush1.xpose.msra.mxu0 %v173
    %177 = vmatprep.subr.mxu0 0.0
    %178 = vmatpush1.xpose.msra.mxu0 0.0
    %179 = vmatprep.subr.mxu0 0.0
    %180 = vmatpush1.xpose.msra.mxu0 0.0
    %181 = vmatprep.subr.mxu0 0.0
    %182 = vmatpush1.xpose.msra.mxu0 0.0
    %183 = vmatprep.subr.mxu0 0.0
    %184 = vmatpush1.xpose.msra.mxu0 0.0
    %185 = vmatprep.subr.mxu0 0.0
    %186 = vmatpush1.xpose.msra.mxu0 0.0
    %187 = vmatprep.subr.mxu0 0.0
    %188 = vmatpush1.xpose.msra.mxu0 0.0
    %189 = vmatprep.subr.mxu0 0.0
    %190 = vmatpush1.xpose.msra.mxu0 0.0
    %191 = vmatprep.subr.mxu0 0.0
    %192 = vmatpush1.xpose.msra.mxu0 0.0
    %193 = vmatprep.subr.mxu0 0.0
    %194 = vmatpush1.xpose.msra.mxu0 0.0
    %195 = vmatprep.subr.mxu0 0.0
    %196 = vmatpush1.xpose.msra.mxu0 0.0
    %197 = vmatprep.subr.mxu0 0.0
    %198 = vmatpush1.xpose.msra.mxu0 0.0
    %199 = vmatprep.subr.mxu0 0.0
    %200 = vmatpush1.xpose.msra.mxu0 0.0
    %201 = vmatprep.subr.mxu0 0.0
    %202 = vmatpush1.xpose.msra.mxu0 0.0
    %203 = vmatprep.subr.mxu0 0.0
    %204 = vmatpush1.xpose.msra.mxu0 0.0
    %205 = vmatprep.subr.mxu0 0.0
    %206 = vmatpush1.xpose.msra.mxu0 0.0
    %207 = vmatprep.subr.mxu0 0.0
    %208 = vmatpush1.xpose.msra.mxu0 0.0
    %209 = vmatprep.subr.mxu0 0.0
    %210 = vmatpush1.xpose.msra.mxu0 0.0
    %211 = vmatprep.subr.mxu0 0.0
    %212 = vmatpush1.xpose.msra.mxu0 0.0
    %213 = vmatprep.subr.mxu0 0.0
    %214 = vmatpush1.xpose.msra.mxu0 0.0
    %215 = vmatprep.subr.mxu0 0.0
    %216 = vmatpush1.xpose.msra.mxu0 0.0
    %217 = vmatprep.subr.mxu0 0.0
    %218 = vmatpush1.xpose.msra.mxu0 0.0
    %219 = vmatprep.subr.mxu0 0.0
    %220 = vmatpush1.xpose.msra.mxu0 0.0
    %221 = vmatprep.subr.mxu0 0.0
    %222 = vmatpush1.xpose.msra.mxu0 0.0
    %223 = vmatprep.subr.mxu0 0.0
    %224 = vmatpush1.xpose.msra.mxu0 0.0
    %225 = vmatprep.subr.mxu0 0.0
    %226 = vmatpush1.xpose.msra.mxu0 0.0
    %227 = vmatprep.subr.mxu0 0.0
    %228 = vmatpush1.xpose.msra.mxu0 0.0
    %229 = vmatprep.subr.mxu0 0.0
    %230 = vmatpush1.xpose.msra.mxu0 0.0
    %231 = vmatprep.subr.mxu0 0.0
    %232 = vmatpush1.xpose.msra.mxu0 0.0
    %233 = vmatprep.subr.mxu0 0.0
    %234 = vmatpush1.xpose.msra.mxu0 0.0
    %235 = vmatprep.subr.mxu0 0.0
    %236 = vmatpush1.xpose.msra.mxu0 0.0
    %237 = vmatprep.subr.mxu0 0.0
    %238 = vmatpush1.xpose.msra.mxu0 0.0
    %239 = vmatprep.mubr.f32.mxu0 0.0
    %240 = vmatmul.mubr.f32.gmra.mrb[0].mxu0 %v170
    %v241 = vpop.f32.mrb[0].mxu0
    %v242 = vadd.f32 0.0, %v241
    %v243 = vpop.f32.mrb[0].mxu0
    %244 = vdwg.mxu0
    %v246 = vsel %vm92, %v82, 0
    %v249 = vsel %vm92, %v86, 0
    %251 = vmatprep.subr.mxu0 0.0
    %252 = vmatpush1.xpose.msra.mxu0 %v249
    %253 = vmatprep.subr.mxu0 0.0
    %254 = vmatpush1.xpose.msra.mxu0 0.0
    %255 = vmatprep.subr.mxu0 0.0
    %256 = vmatpush1.xpose.msra.mxu0 0.0
    %257 = vmatprep.subr.mxu0 0.0
    %258 = vmatpush1.xpose.msra.mxu0 0.0
    %259 = vmatprep.subr.mxu0 0.0
    %260 = vmatpush1.xpose.msra.mxu0 0.0
    %261 = vmatprep.subr.mxu0 0.0
    %262 = vmatpush1.xpose.msra.mxu0 0.0
    %263 = vmatprep.subr.mxu0 0.0
    %264 = vmatpush1.xpose.msra.mxu0 0.0
    %265 = vmatprep.subr.mxu0 0.0
    %266 = vmatpush1.xpose.msra.mxu0 0.0
    %267 = vmatprep.subr.mxu0 0.0
    %268 = vmatpush1.xpose.msra.mxu0 0.0
    %269 = vmatprep.subr.mxu0 0.0
    %270 = vmatpush1.xpose.msra.mxu0 0.0
    %271 = vmatprep.subr.mxu0 0.0
    %272 = vmatpush1.xpose.msra.mxu0 0.0
    %273 = vmatprep.subr.mxu0 0.0
    %274 = vmatpush1.xpose.msra.mxu0 0.0
    %275 = vmatprep.subr.mxu0 0.0
    %276 = vmatpush1.xpose.msra.mxu0 0.0
    %277 = vmatprep.subr.mxu0 0.0
    %278 = vmatpush1.xpose.msra.mxu0 0.0
    %279 = vmatprep.subr.mxu0 0.0
    %280 = vmatpush1.xpose.msra.mxu0 0.0
    %281 = vmatprep.subr.mxu0 0.0
    %282 = vmatpush1.xpose.msra.mxu0 0.0
    %283 = vmatprep.subr.mxu0 0.0
    %284 = vmatpush1.xpose.msra.mxu0 0.0
    %285 = vmatprep.subr.mxu0 0.0
    %286 = vmatpush1.xpose.msra.mxu0 0.0
    %287 = vmatprep.subr.mxu0 0.0
    %288 = vmatpush1.xpose.msra.mxu0 0.0
    %289 = vmatprep.subr.mxu0 0.0
    %290 = vmatpush1.xpose.msra.mxu0 0.0
    %291 = vmatprep.subr.mxu0 0.0
    %292 = vmatpush1.xpose.msra.mxu0 0.0
    %293 = vmatprep.subr.mxu0 0.0
    %294 = vmatpush1.xpose.msra.mxu0 0.0
    %295 = vmatprep.subr.mxu0 0.0
    %296 = vmatpush1.xpose.msra.mxu0 0.0
    %297 = vmatprep.subr.mxu0 0.0
    %298 = vmatpush1.xpose.msra.mxu0 0.0
    %299 = vmatprep.subr.mxu0 0.0
    %300 = vmatpush1.xpose.msra.mxu0 0.0
    %301 = vmatprep.subr.mxu0 0.0
    %302 = vmatpush1.xpose.msra.mxu0 0.0
    %303 = vmatprep.subr.mxu0 0.0
    %304 = vmatpush1.xpose.msra.mxu0 0.0
    %305 = vmatprep.subr.mxu0 0.0
    %306 = vmatpush1.xpose.msra.mxu0 0.0
    %307 = vmatprep.subr.mxu0 0.0
    %308 = vmatpush1.xpose.msra.mxu0 0.0
    %309 = vmatprep.subr.mxu0 0.0
    %310 = vmatpush1.xpose.msra.mxu0 0.0
    %311 = vmatprep.subr.mxu0 0.0
    %312 = vmatpush1.xpose.msra.mxu0 0.0
    %313 = vmatprep.subr.mxu0 0.0
    %314 = vmatpush1.xpose.msra.mxu0 0.0
    %315 = vmatprep.mubr.f32.mxu0 0.0
    %316 = vmatmul.mubr.f32.gmra.mrb[0].mxu0 %v246
    %v317 = vpop.f32.mrb[0].mxu0
    %v318 = vadd.f32 0.0, %v317
    %v319 = vpop.f32.mrb[0].mxu0
    %320 = vdwg.mxu0
    %v322 = vsel %vm92, %v83, 0
    %v325 = vsel %vm92, %v87, 0
    %327 = vmatprep.subr.mxu0 0.0
    %328 = vmatpush1.xpose.msra.mxu0 %v325
    %329 = vmatprep.subr.mxu0 0.0
    %330 = vmatpush1.xpose.msra.mxu0 0.0
    %331 = vmatprep.subr.mxu0 0.0
    %332 = vmatpush1.xpose.msra.mxu0 0.0
    %333 = vmatprep.subr.mxu0 0.0
    %334 = vmatpush1.xpose.msra.mxu0 0.0
    %335 = vmatprep.subr.mxu0 0.0
    %336 = vmatpush1.xpose.msra.mxu0 0.0
    %337 = vmatprep.subr.mxu0 0.0
    %338 = vmatpush1.xpose.msra.mxu0 0.0
    %339 = vmatprep.subr.mxu0 0.0
    %340 = vmatpush1.xpose.msra.mxu0 0.0
    %341 = vmatprep.subr.mxu0 0.0
    %342 = vmatpush1.xpose.msra.mxu0 0.0
    %343 = vmatprep.subr.mxu0 0.0
    %344 = vmatpush1.xpose.msra.mxu0 0.0
    %345 = vmatprep.subr.mxu0 0.0
    %346 = vmatpush1.xpose.msra.mxu0 0.0
    %347 = vmatprep.subr.mxu0 0.0
    %348 = vmatpush1.xpose.msra.mxu0 0.0
    %349 = vmatprep.subr.mxu0 0.0
    %350 = vmatpush1.xpose.msra.mxu0 0.0
    %351 = vmatprep.subr.mxu0 0.0
    %352 = vmatpush1.xpose.msra.mxu0 0.0
    %353 = vmatprep.subr.mxu0 0.0
    %354 = vmatpush1.xpose.msra.mxu0 0.0
    %355 = vmatprep.subr.mxu0 0.0
    %356 = vmatpush1.xpose.msra.mxu0 0.0
    %357 = vmatprep.subr.mxu0 0.0
    %358 = vmatpush1.xpose.msra.mxu0 0.0
    %359 = vmatprep.subr.mxu0 0.0
    %360 = vmatpush1.xpose.msra.mxu0 0.0
    %361 = vmatprep.subr.mxu0 0.0
    %362 = vmatpush1.xpose.msra.mxu0 0.0
    %363 = vmatprep.subr.mxu0 0.0
    %364 = vmatpush1.xpose.msra.mxu0 0.0
    %365 = vmatprep.subr.mxu0 0.0
    %366 = vmatpush1.xpose.msra.mxu0 0.0
    %367 = vmatprep.subr.mxu0 0.0
    %368 = vmatpush1.xpose.msra.mxu0 0.0
    %369 = vmatprep.subr.mxu0 0.0
    %370 = vmatpush1.xpose.msra.mxu0 0.0
    %371 = vmatprep.subr.mxu0 0.0
    %372 = vmatpush1.xpose.msra.mxu0 0.0
    %373 = vmatprep.subr.mxu0 0.0
    %374 = vmatpush1.xpose.msra.mxu0 0.0
    %375 = vmatprep.subr.mxu0 0.0
    %376 = vmatpush1.xpose.msra.mxu0 0.0
    %377 = vmatprep.subr.mxu0 0.0
    %378 = vmatpush1.xpose.msra.mxu0 0.0
    %379 = vmatprep.subr.mxu0 0.0
    %380 = vmatpush1.xpose.msra.mxu0 0.0
    %381 = vmatprep.subr.mxu0 0.0
    %382 = vmatpush1.xpose.msra.mxu0 0.0
    %383 = vmatprep.subr.mxu0 0.0
    %384 = vmatpush1.xpose.msra.mxu0 0.0
    %385 = vmatprep.subr.mxu0 0.0
    %386 = vmatpush1.xpose.msra.mxu0 0.0
    %387 = vmatprep.subr.mxu0 0.0
    %388 = vmatpush1.xpose.msra.mxu0 0.0
    %389 = vmatprep.subr.mxu0 0.0
    %390 = vmatpush1.xpose.msra.mxu0 0.0
    %391 = vmatprep.mubr.f32.mxu0 0.0
    %392 = vmatmul.mubr.f32.gmra.mrb[0].mxu0 %v322
    %v393 = vpop.f32.mrb[0].mxu0
    %v394 = vadd.f32 0.0, %v393
    %v395 = vpop.f32.mrb[0].mxu0
    %396 = vdwg.mxu0
    %v397 = vld [vmem:[#allocation8] sm:$0xff]
    %v398 = vld [vmem:[#allocation8 + $0x8] sm:$0xff]
    %v399 = vld [vmem:[#allocation8 + $0x10] sm:$0xff]
    %v400 = vld [vmem:[#allocation8 + $0x18] sm:$0xff]
    %vm401 = vcmp.ne.s32.totalorder %v397, 0
    %vm402 = vcmp.ne.s32.totalorder %v398, 0
    %vm403 = vcmp.ne.s32.totalorder %v399, 0
    %vm404 = vcmp.ne.s32.totalorder %v400, 0
    %v405 = vsel %vm401, -1e+09, %v166
    %v406 = vsel %vm402, -1e+09, %v242
    %v407 = vsel %vm403, -1e+09, %v318
    %v408 = vsel %vm404, -1e+09, %v394
    %vm409 = vcmask 64512
    %v410 = vsel %vm409, %v405, -inf
    %411 = vmax.xlane.f32.xlu0 %v410
    %v412 = vpop.xlane.xlu0 %411
    %v413 = vsel %vm409, %v406, -inf
    %414 = vmax.xlane.f32.xlu0 %v413
    %v415 = vpop.xlane.xlu0 %414
    %v416 = vsel %vm409, %v407, -inf
    %417 = vmax.xlane.f32.xlu0 %v416
    %v418 = vpop.xlane.xlu0 %417
    %v419 = vsel %vm409, %v408, -inf
    %420 = vmax.xlane.f32.xlu0 %v419
    %v421 = vpop.xlane.xlu0 %420
    %v422 = vsub.f32 %v405, %v412
    %v423 = vsub.f32 %v406, %v415
    %v424 = vsub.f32 %v407, %v418
    %v425 = vsub.f32 %v408, %v421
    %v426 = vmul.f32 %v422, 1.442695
    %v427 = vpow.pop %v426
    %v428 = vmul.f32 %v423, 1.442695
    %v429 = vpow.pop %v428
    %v430 = vmul.f32 %v424, 1.442695
    %v431 = vpow.pop %v430
    %v432 = vmul.f32 %v425, 1.442695
    %v433 = vpow.pop %v432
    %v434 = vsel %vm409, %v427, 0.0
    %435 = vadd.xlane.f32.xlu0 %v434
    %v436 = vpop.xlane.xlu0 %435
    %v437 = vsel %vm409, %v429, 0.0
    %438 = vadd.xlane.f32.xlu0 %v437
    %v439 = vpop.xlane.xlu0 %438
    %v440 = vsel %vm409, %v431, 0.0
    %441 = vadd.xlane.f32.xlu0 %v440
    %v442 = vpop.xlane.xlu0 %441
    %v443 = vsel %vm409, %v433, 0.0
    %444 = vadd.xlane.f32.xlu0 %v443
    %v445 = vpop.xlane.xlu0 %444
    %v446 = vrcp.pop %v436
    %v447 = vrcp.pop %v439
    %v448 = vrcp.pop %v442
    %v449 = vrcp.pop %v445
    %v450 = vmul.f32 %v436, %v446
    %v451 = vmul.f32 %v439, %v447
    %v452 = vmul.f32 %v442, %v448
    %v453 = vmul.f32 %v445, %v449
    %v454 = vsub.f32 2.0, %v450
    %v455 = vsub.f32 2.0, %v451
    %v456 = vsub.f32 2.0, %v452
    %v457 = vsub.f32 2.0, %v453
    %v458 = vmul.f32 %v446, %v454
    %v459 = vmul.f32 %v447, %v455
    %v460 = vmul.f32 %v448, %v456
    %v461 = vmul.f32 %v449, %v457
    %v462 = vmul.f32 %v427, %v458
    %v463 = vmul.f32 %v429, %v459
    %v464 = vmul.f32 %v431, %v460
    %v465 = vmul.f32 %v433, %v461
    %v467 = vsel %vm409, %v462, 0
    %469 = vmatprep.subr.mxu0 0.0
    %470 = vmatpush1.msra.mxu0 %v88
    %471 = vmatprep.subr.mxu0 0.0
    %472 = vmatpush1.msra.mxu0 0.0
    %473 = vmatprep.subr.mxu0 0.0
    %474 = vmatpush1.msra.mxu0 0.0
    %475 = vmatprep.subr.mxu0 0.0
    %476 = vmatpush1.msra.mxu0 0.0
    %477 = vmatprep.subr.mxu0 0.0
    %478 = vmatpush1.msra.mxu0 0.0
    %479 = vmatprep.subr.mxu0 0.0
    %480 = vmatpush1.msra.mxu0 0.0
    %481 = vmatprep.subr.mxu0 0.0
    %482 = vmatpush1.msra.mxu0 0.0
    %483 = vmatprep.subr.mxu0 0.0
    %484 = vmatpush1.msra.mxu0 0.0
    %485 = vmatprep.subr.mxu0 0.0
    %486 = vmatpush1.msra.mxu0 0.0
    %487 = vmatprep.subr.mxu0 0.0
    %488 = vmatpush1.msra.mxu0 0.0
    %489 = vmatprep.subr.mxu0 0.0
    %490 = vmatpush1.msra.mxu0 0.0
    %491 = vmatprep.subr.mxu0 0.0
    %492 = vmatpush1.msra.mxu0 0.0
    %493 = vmatprep.subr.mxu0 0.0
    %494 = vmatpush1.msra.mxu0 0.0
    %495 = vmatprep.subr.mxu0 0.0
    %496 = vmatpush1.msra.mxu0 0.0
    %497 = vmatprep.subr.mxu0 0.0
    %498 = vmatpush1.msra.mxu0 0.0
    %499 = vmatprep.subr.mxu0 0.0
    %500 = vmatpush1.msra.mxu0 0.0
    %501 = vmatprep.subr.mxu0 0.0
    %502 = vmatpush1.msra.mxu0 0.0
    %503 = vmatprep.subr.mxu0 0.0
    %504 = vmatpush1.msra.mxu0 0.0
    %505 = vmatprep.subr.mxu0 0.0
    %506 = vmatpush1.msra.mxu0 0.0
    %507 = vmatprep.subr.mxu0 0.0
    %508 = vmatpush1.msra.mxu0 0.0
    %509 = vmatprep.subr.mxu0 0.0
    %510 = vmatpush1.msra.mxu0 0.0
    %511 = vmatprep.subr.mxu0 0.0
    %512 = vmatpush1.msra.mxu0 0.0
    %513 = vmatprep.subr.mxu0 0.0
    %514 = vmatpush1.msra.mxu0 0.0
    %515 = vmatprep.subr.mxu0 0.0
    %516 = vmatpush1.msra.mxu0 0.0
    %517 = vmatprep.subr.mxu0 0.0
    %518 = vmatpush1.msra.mxu0 0.0
    %519 = vmatprep.subr.mxu0 0.0
    %520 = vmatpush1.msra.mxu0 0.0
    %521 = vmatprep.subr.mxu0 0.0
    %522 = vmatpush1.msra.mxu0 0.0
    %523 = vmatprep.subr.mxu0 0.0
    %524 = vmatpush1.msra.mxu0 0.0
    %525 = vmatprep.subr.mxu0 0.0
    %526 = vmatpush1.msra.mxu0 0.0
    %527 = vmatprep.subr.mxu0 0.0
    %528 = vmatpush1.msra.mxu0 0.0
    %529 = vmatprep.subr.mxu0 0.0
    %530 = vmatpush1.msra.mxu0 0.0
    %531 = vmatprep.subr.mxu0 0.0
    %532 = vmatpush1.msra.mxu0 0.0
    %533 = vmatprep.mubr.f32.mxu0 0.0
    %534 = vmatmul.mubr.f32.gmra.mrb[0].mxu0 %v467
    %v535 = vpop.f32.mrb[0].mxu0
    %v536 = vadd.f32 0.0, %v535
    %v537 = vpop.f32.mrb[0].mxu0
    %538 = vdwg.mxu0
    %v540 = vsel %vm409, %v463, 0
    %542 = vmatprep.subr.mxu0 0.0
    %543 = vmatpush1.msra.mxu0 %v89
    %544 = vmatprep.subr.mxu0 0.0
    %545 = vmatpush1.msra.mxu0 0.0
    %546 = vmatprep.subr.mxu0 0.0
    %547 = vmatpush1.msra.mxu0 0.0
    %548 = vmatprep.subr.mxu0 0.0
    %549 = vmatpush1.msra.mxu0 0.0
    %550 = vmatprep.subr.mxu0 0.0
    %551 = vmatpush1.msra.mxu0 0.0
    %552 = vmatprep.subr.mxu0 0.0
    %553 = vmatpush1.msra.mxu0 0.0
    %554 = vmatprep.subr.mxu0 0.0
    %555 = vmatpush1.msra.mxu0 0.0
    %556 = vmatprep.subr.mxu0 0.0
    %557 = vmatpush1.msra.mxu0 0.0
    %558 = vmatprep.subr.mxu0 0.0
    %559 = vmatpush1.msra.mxu0 0.0
    %560 = vmatprep.subr.mxu0 0.0
    %561 = vmatpush1.msra.mxu0 0.0
    %562 = vmatprep.subr.mxu0 0.0
    %563 = vmatpush1.msra.mxu0 0.0
    %564 = vmatprep.subr.mxu0 0.0
    %565 = vmatpush1.msra.mxu0 0.0
    %566 = vmatprep.subr.mxu0 0.0
    %567 = vmatpush1.msra.mxu0 0.0
    %568 = vmatprep.subr.mxu0 0.0
    %569 = vmatpush1.msra.mxu0 0.0
    %570 = vmatprep.subr.mxu0 0.0
    %571 = vmatpush1.msra.mxu0 0.0
    %572 = vmatprep.subr.mxu0 0.0
    %573 = vmatpush1.msra.mxu0 0.0
    %574 = vmatprep.subr.mxu0 0.0
    %575 = vmatpush1.msra.mxu0 0.0
    %576 = vmatprep.subr.mxu0 0.0
    %577 = vmatpush1.msra.mxu0 0.0
    %578 = vmatprep.subr.mxu0 0.0
    %579 = vmatpush1.msra.mxu0 0.0
    %580 = vmatprep.subr.mxu0 0.0
    %581 = vmatpush1.msra.mxu0 0.0
    %582 = vmatprep.subr.mxu0 0.0
    %583 = vmatpush1.msra.mxu0 0.0
    %584 = vmatprep.subr.mxu0 0.0
    %585 = vmatpush1.msra.mxu0 0.0
    %586 = vmatprep.subr.mxu0 0.0
    %587 = vmatpush1.msra.mxu0 0.0
    %588 = vmatprep.subr.mxu0 0.0
    %589 = vmatpush1.msra.mxu0 0.0
    %590 = vmatprep.subr.mxu0 0.0
    %591 = vmatpush1.msra.mxu0 0.0
    %592 = vmatprep.subr.mxu0 0.0
    %593 = vmatpush1.msra.mxu0 0.0
    %594 = vmatprep.subr.mxu0 0.0
    %595 = vmatpush1.msra.mxu0 0.0
    %596 = vmatprep.subr.mxu0 0.0
    %597 = vmatpush1.msra.mxu0 0.0
    %598 = vmatprep.subr.mxu0 0.0
    %599 = vmatpush1.msra.mxu0 0.0
    %600 = vmatprep.subr.mxu0 0.0
    %601 = vmatpush1.msra.mxu0 0.0
    %602 = vmatprep.subr.mxu0 0.0
    %603 = vmatpush1.msra.mxu0 0.0
    %604 = vmatprep.subr.mxu0 0.0
    %605 = vmatpush1.msra.mxu0 0.0
    %606 = vmatprep.mubr.f32.mxu0 0.0
    %607 = vmatmul.mubr.f32.gmra.mrb[0].mxu0 %v540
    %v608 = vpop.f32.mrb[0].mxu0
    %v609 = vadd.f32 0.0, %v608
    %v610 = vpop.f32.mrb[0].mxu0
    %611 = vdwg.mxu0
    %v613 = vsel %vm409, %v464, 0
    %615 = vmatprep.subr.mxu0 0.0
    %616 = vmatpush1.msra.mxu0 %v90
    %617 = vmatprep.subr.mxu0 0.0
    %618 = vmatpush1.msra.mxu0 0.0
    %619 = vmatprep.subr.mxu0 0.0
    %620 = vmatpush1.msra.mxu0 0.0
    %621 = vmatprep.subr.mxu0 0.0
    %622 = vmatpush1.msra.mxu0 0.0
    %623 = vmatprep.subr.mxu0 0.0
    %624 = vmatpush1.msra.mxu0 0.0
    %625 = vmatprep.subr.mxu0 0.0
    %626 = vmatpush1.msra.mxu0 0.0
    %627 = vmatprep.subr.mxu0 0.0
    %628 = vmatpush1.msra.mxu0 0.0
    %629 = vmatprep.subr.mxu0 0.0
    %630 = vmatpush1.msra.mxu0 0.0
    %631 = vmatprep.subr.mxu0 0.0
    %632 = vmatpush1.msra.mxu0 0.0
    %633 = vmatprep.subr.mxu0 0.0
    %634 = vmatpush1.msra.mxu0 0.0
    %635 = vmatprep.subr.mxu0 0.0
    %636 = vmatpush1.msra.mxu0 0.0
    %637 = vmatprep.subr.mxu0 0.0
    %638 = vmatpush1.msra.mxu0 0.0
    %639 = vmatprep.subr.mxu0 0.0
    %640 = vmatpush1.msra.mxu0 0.0
    %641 = vmatprep.subr.mxu0 0.0
    %642 = vmatpush1.msra.mxu0 0.0
    %643 = vmatprep.subr.mxu0 0.0
    %644 = vmatpush1.msra.mxu0 0.0
    %645 = vmatprep.subr.mxu0 0.0
    %646 = vmatpush1.msra.mxu0 0.0
    %647 = vmatprep.subr.mxu0 0.0
    %648 = vmatpush1.msra.mxu0 0.0
    %649 = vmatprep.subr.mxu0 0.0
    %650 = vmatpush1.msra.mxu0 0.0
    %651 = vmatprep.subr.mxu0 0.0
    %652 = vmatpush1.msra.mxu0 0.0
    %653 = vmatprep.subr.mxu0 0.0
    %654 = vmatpush1.msra.mxu0 0.0
    %655 = vmatprep.subr.mxu0 0.0
    %656 = vmatpush1.msra.mxu0 0.0
    %657 = vmatprep.subr.mxu0 0.0
    %658 = vmatpush1.msra.mxu0 0.0
    %659 = vmatprep.subr.mxu0 0.0
    %660 = vmatpush1.msra.mxu0 0.0
    %661 = vmatprep.subr.mxu0 0.0
    %662 = vmatpush1.msra.mxu0 0.0
    %663 = vmatprep.subr.mxu0 0.0
    %664 = vmatpush1.msra.mxu0 0.0
    %665 = vmatprep.subr.mxu0 0.0
    %666 = vmatpush1.msra.mxu0 0.0
    %667 = vmatprep.subr.mxu0 0.0
    %668 = vmatpush1.msra.mxu0 0.0
    %669 = vmatprep.subr.mxu0 0.0
    %670 = vmatpush1.msra.mxu0 0.0
    %671 = vmatprep.subr.mxu0 0.0
    %672 = vmatpush1.msra.mxu0 0.0
    %673 = vmatprep.subr.mxu0 0.0
    %674 = vmatpush1.msra.mxu0 0.0
    %675 = vmatprep.subr.mxu0 0.0
    %676 = vmatpush1.msra.mxu0 0.0
    %677 = vmatprep.subr.mxu0 0.0
    %678 = vmatpush1.msra.mxu0 0.0
    %679 = vmatprep.mubr.f32.mxu0 0.0
    %680 = vmatmul.mubr.f32.gmra.mrb[0].mxu0 %v613
    %v681 = vpop.f32.mrb[0].mxu0
    %v682 = vadd.f32 0.0, %v681
    %v683 = vpop.f32.mrb[0].mxu0
    %684 = vdwg.mxu0
    %v686 = vsel %vm409, %v465, 0
    %688 = vmatprep.subr.mxu0 0.0
    %689 = vmatpush1.msra.mxu0 %v91
    %690 = vmatprep.subr.mxu0 0.0
    %691 = vmatpush1.msra.mxu0 0.0
    %692 = vmatprep.subr.mxu0 0.0
    %693 = vmatpush1.msra.mxu0 0.0
    %694 = vmatprep.subr.mxu0 0.0
    %695 = vmatpush1.msra.mxu0 0.0
    %696 = vmatprep.subr.mxu0 0.0
    %697 = vmatpush1.msra.mxu0 0.0
    %698 = vmatprep.subr.mxu0 0.0
    %699 = vmatpush1.msra.mxu0 0.0
    %700 = vmatprep.subr.mxu0 0.0
    %701 = vmatpush1.msra.mxu0 0.0
    %702 = vmatprep.subr.mxu0 0.0
    %703 = vmatpush1.msra.mxu0 0.0
    %704 = vmatprep.subr.mxu0 0.0
    %705 = vmatpush1.msra.mxu0 0.0
    %706 = vmatprep.subr.mxu0 0.0
    %707 = vmatpush1.msra.mxu0 0.0
    %708 = vmatprep.subr.mxu0 0.0
    %709 = vmatpush1.msra.mxu0 0.0
    %710 = vmatprep.subr.mxu0 0.0
    %711 = vmatpush1.msra.mxu0 0.0
    %712 = vmatprep.subr.mxu0 0.0
    %713 = vmatpush1.msra.mxu0 0.0
    %714 = vmatprep.subr.mxu0 0.0
    %715 = vmatpush1.msra.mxu0 0.0
    %716 = vmatprep.subr.mxu0 0.0
    %717 = vmatpush1.msra.mxu0 0.0
    %718 = vmatprep.subr.mxu0 0.0
    %719 = vmatpush1.msra.mxu0 0.0
    %720 = vmatprep.subr.mxu0 0.0
    %721 = vmatpush1.msra.mxu0 0.0
    %722 = vmatprep.subr.mxu0 0.0
    %723 = vmatpush1.msra.mxu0 0.0
    %724 = vmatprep.subr.mxu0 0.0
    %725 = vmatpush1.msra.mxu0 0.0
    %726 = vmatprep.subr.mxu0 0.0
    %727 = vmatpush1.msra.mxu0 0.0
    %728 = vmatprep.subr.mxu0 0.0
    %729 = vmatpush1.msra.mxu0 0.0
    %730 = vmatprep.subr.mxu0 0.0
    %731 = vmatpush1.msra.mxu0 0.0
    %732 = vmatprep.subr.mxu0 0.0
    %733 = vmatpush1.msra.mxu0 0.0
    %734 = vmatprep.subr.mxu0 0.0
    %735 = vmatpush1.msra.mxu0 0.0
    %736 = vmatprep.subr.mxu0 0.0
    %737 = vmatpush1.msra.mxu0 0.0
    %738 = vmatprep.subr.mxu0 0.0
    %739 = vmatpush1.msra.mxu0 0.0
    %740 = vmatprep.subr.mxu0 0.0
    %741 = vmatpush1.msra.mxu0 0.0
    %742 = vmatprep.subr.mxu0 0.0
    %743 = vmatpush1.msra.mxu0 0.0
    %744 = vmatprep.subr.mxu0 0.0
    %745 = vmatpush1.msra.mxu0 0.0
    %746 = vmatprep.subr.mxu0 0.0
    %747 = vmatpush1.msra.mxu0 0.0
    %748 = vmatprep.subr.mxu0 0.0
    %749 = vmatpush1.msra.mxu0 0.0
    %750 = vmatprep.subr.mxu0 0.0
    %751 = vmatpush1.msra.mxu0 0.0
    %752 = vmatprep.mubr.f32.mxu0 0.0
    %753 = vmatmul.mubr.f32.gmra.mrb[0].mxu0 %v686
    %v754 = vpop.f32.mrb[0].mxu0
    %v755 = vadd.f32 0.0, %v754
    %v756 = vpop.f32.mrb[0].mxu0
    %757 = vdwg.mxu0
    %758 = vst.msk [vmem:[#allocation10] sm:$0xff] %vm92, %v536
    %759 = vst.msk [vmem:[#allocation10 + $0x8] sm:$0xff] %vm92, %v609
    %760 = vst.msk [vmem:[#allocation10 + $0x10] sm:$0xff] %vm92, %v682
    %761 = vst.msk [vmem:[#allocation10 + $0x18] sm:$0xff] %vm92, %v755
    %762 = vst.msk [vmem:[#allocation11] sm:$0xff] %vm409, %v462
    %763 = vst.msk [vmem:[#allocation11 + $0x8] sm:$0xff] %vm409, %v463
    %764 = vst.msk [vmem:[#allocation11 + $0x10] sm:$0xff] %vm409, %v464
    %765 = vst.msk [vmem:[#allocation11 + $0x18] sm:$0xff] %vm409, %v465
    // Predicated region
    $region34: #{tpu_custom_call.1} parent=1 // pred_check
      _
    $region35: #{tpu_custom_call.1} parent=1 // pred_check_branch
      %767 = sbr.rel (0) target = $region37
    $region36: #{tpu_custom_call.1} parent=1 // pred_region
      %s769 = ssub.s32 512, 512
      %770 = vsyncadd [#allocation4], %s769
      %s771 = sshll.u32 [#allocation10], 4
      %s772 = int_to_ptr.vmem [resolvable:$true] %s771
      %777 = dma.vmem_to_hbm [thread:$0]  %s772, 512, %s4, [#allocation4], 128, 128, 8
    $region37: #{tpu_custom_call.1} parent=1 // pred_fallthru
      _
    // Predicated region
    $region38: #{tpu_custom_call.1} parent=1 // pred_check
      _
    $region39: #{tpu_custom_call.1} parent=1 // pred_check_branch
      %779 = sbr.rel (0) target = $region41
    $region40: #{tpu_custom_call.1} parent=1 // pred_region
      %s781 = ssub.s32 512, 512
      %782 = vsyncadd [#allocation12], %s781
      %s783 = sshll.u32 [#allocation11], 4
      %s784 = int_to_ptr.vmem [resolvable:$true] %s783
      %789 = dma.vmem_to_hbm [thread:$0]  %s784, 512, %s5, [#allocation12], 128, 128, 8
    $region41: #{tpu_custom_call.1} parent=1 // pred_fallthru
      _
    // Predicated region
    $region42: #{tpu_custom_call.1} parent=1 // pred_check
      _
    $region43: #{tpu_custom_call.1} parent=1 // pred_check_branch
      %791 = sbr.rel (0) target = $region45
    $region44: #{tpu_custom_call.1} parent=1 // pred_region
      %792 = dma.done [#allocation4], 512
    $region45: #{tpu_custom_call.1} parent=1 // pred_fallthru
      _
    // Predicated region
    $region46: #{tpu_custom_call.1} parent=1 // pred_check
      _
    $region47: #{tpu_custom_call.1} parent=1 // pred_check_branch
      %794 = sbr.rel (0) target = $region49
    $region48: #{tpu_custom_call.1} parent=1 // pred_region
      %795 = dma.done [#allocation12], 512
    $region49: #{tpu_custom_call.1} parent=1 // pred_fallthru
      _
    %796 = vsyncpa [#allocation3], 1
    %797 = vsyncpa [#allocation6], 1
    %798 = vsyncpa [#allocation9], 1
    %799 = vsyncpa [#allocation4], 1
    %800 = vsyncpa [#allocation12], 1

</llo_original>
